<compile_context>
chip_gen: v7x
topology: tpu7x:2x2x1
jax: 0.10.0
libtpu: 0.0.40
codegen_flags: <defaults>
</compile_context>

<pallas_src>
import jax
import jax.numpy as jnp
from jax.experimental import pallas as pl
from jax.experimental.pallas import tpu as pltpu


def add_bias_kernel(x_ref, b_ref, o_ref):
    # Pure VPU streaming add: (TB, TN) x-tile + (1, TN) bias row, broadcast
    # over the sublane (batch) axis.
    o_ref[...] = x_ref[...] + b_ref[...]


def _sublane_align(dtype) -> int:
    # 8 rows/vreg for 4-byte dtypes, 16 for bf16, 32 for 1-byte dtypes.
    itemsize = jnp.dtype(dtype).itemsize
    return max(8, 32 // itemsize)


def _pick_tile(dim: int, pref: int, align: int) -> int:
    """Largest legal tile <= pref. Full-extent blocks are always legal."""
    if dim <= pref:
        return dim
    t = (pref // align) * align
    return max(t, align)


def add_bias(x: jax.Array, bias_param: jax.Array) -> jax.Array:
    """Pallas equivalent of AddBias.forward.

    bias_param has shape (N, 1) (matching nn.Parameter(bias.unsqueeze(1))).
    Forward: x + bias_param.t().view(1, -1)
    """
    assert x.ndim == 2, "expected x of shape (B, N)"
    B, N = x.shape
    assert bias_param.shape == (N, 1)

    # (N, 1) -> (1, N), exactly bias.t().view(1, -1).
    bias_row = bias_param.reshape(1, N).astype(x.dtype)

    # Lane-dense fold: if N < 128 and it divides 128, pack k = 128 // N
    # consecutive batch rows into one lane-dense row of width k*N == 128.
    fold = 1
    if N < 128 and 128 % N == 0:
        k = 128 // N
        if B >= k and B % k == 0:
            fold = k

    if fold > 1:
        x_work = x.reshape(B // fold, fold * N)
        bias_work = jnp.tile(bias_row, (1, fold))
    else:
        x_work = x
        bias_work = bias_row
    Bw, Nw = x_work.shape

    # Tile sizes: ~(512, 1024) f32 preference (=> ~2 MiB/tile, ~8-9 MiB
    # double-buffered working set: safe on v5e/v6e/v7x scoped-VMEM defaults).
    sub = _sublane_align(x.dtype)
    TB = _pick_tile(Bw, 512, sub)
    TN = _pick_tile(Nw, 1024, 128)
    grid = (pl.cdiv(Bw, TB), pl.cdiv(Nw, TN))

    out = pl.pallas_call(
        add_bias_kernel,
        out_shape=jax.ShapeDtypeStruct((Bw, Nw), x.dtype),
        grid=grid,
        in_specs=[
            # x tile follows both grid axes.
            pl.BlockSpec((TB, TN), lambda i, j: (i, j)),
            # bias tile depends only on the feature axis -> stays hot in VMEM
            # while iterating over batch tiles.
            pl.BlockSpec((1, TN), lambda i, j: (0, j)),
        ],
        out_specs=pl.BlockSpec((TB, TN), lambda i, j: (i, j)),
        compiler_params=pltpu.CompilerParams(
            # Both axes are independent elementwise work: let Mosaic shard
            # them across TensorCores (2 TCs on v7x; harmless on v5e/v6e).
            dimension_semantics=("parallel", "parallel"),
        ),
    )(x_work, bias_work)

    if fold > 1:
        out = out.reshape(B, N)
    return out


if __name__ == "__main__":
    key = jax.random.PRNGKey(0)
    kx, kb = jax.random.split(key)

    B, N = 8, 32  # small shapes: batch=8, hidden=32
    x = jax.random.normal(kx, (B, N), dtype=jnp.float32)

    # Deterministic parameter init: bias vector (N,) -> stored as (N, 1)
    # mirroring nn.Parameter(bias.unsqueeze(1)).
    bias_vec = jax.random.normal(kb, (N,), dtype=jnp.float32)
    bias_param = bias_vec[:, None]  # (N, 1)

    out = add_bias(x, bias_param)
    jax.block_until_ready(out)

    # Reference check (plain JAX)
    ref = x + bias_param.T.reshape(1, -1)
    assert jnp.allclose(out, ref, atol=1e-6), "mismatch vs reference"

    print("KERNEL_OK")
</pallas_src>

<mosaic_0001>
module attributes {stable_mosaic.version = 11 : i64} {
  func.func @add_bias_kernel(%arg0: i32, %arg1: i32, %arg2: memref<2x128xf32, #tpu.memory_space<vmem>>, %arg3: memref<1x128xf32, #tpu.memory_space<vmem>>, %arg4: memref<2x128xf32, #tpu.memory_space<vmem>>) attributes {dimension_semantics = [#tpu.dimension_semantics<parallel>, #tpu.dimension_semantics<parallel>], iteration_bounds = array<i64: 1, 1>, scalar_prefetch = 0 : i64, scratch_operands = 0 : i64, tpu.core_type = #tpu.core_type<tc>, window_params = [{transform_indices = @transform_0, window_bounds = array<i64: 2, 128>}, {transform_indices = @transform_1, window_bounds = array<i64: 1, 128>}, {transform_indices = @transform_2, window_bounds = array<i64: 2, 128>}]} {
    %c0 = arith.constant 0 : index
    %c0_0 = arith.constant 0 : index
    %0 = vector.load %arg2[%c0, %c0_0] : memref<2x128xf32, #tpu.memory_space<vmem>>, vector<2x128xf32>
    %c0_1 = arith.constant 0 : index
    %c0_2 = arith.constant 0 : index
    %1 = vector.load %arg3[%c0_1, %c0_2] : memref<1x128xf32, #tpu.memory_space<vmem>>, vector<1x128xf32>
    %2 = vector.broadcast %1 : vector<1x128xf32> to vector<2x128xf32>
    %3 = arith.addf %0, %2 : vector<2x128xf32>
    %c0_3 = arith.constant 0 : index
    %c0_4 = arith.constant 0 : index
    %4 = vector.load %arg4[%c0_3, %c0_4] : memref<2x128xf32, #tpu.memory_space<vmem>>, vector<2x128xf32>
    tpu.vector_store %arg4[%c0_3, %c0_4], %3 {strides = array<i32>} : memref<2x128xf32, #tpu.memory_space<vmem>>, vector<2x128xf32>,
    return
  }
  func.func @transform_0(%arg0: i32, %arg1: i32) -> (i32, i32) {
    %c0_i32 = arith.constant 0 : i32
    return %arg0, %arg1 : i32, i32
  }
  func.func @transform_1(%arg0: i32, %arg1: i32) -> (i32, i32) {
    %c0_i32 = arith.constant 0 : i32
    %c0_i32_0 = arith.constant 0 : i32
    return %c0_i32, %arg1 : i32, i32
  }
  func.func @transform_2(%arg0: i32, %arg1: i32) -> (i32, i32) {
    %c0_i32 = arith.constant 0 : i32
    return %arg0, %arg1 : i32, i32
  }
}

</mosaic_0001>

<llo_original>
// kernel: tpu_custom_call.1
$region0: #{tpu_custom_call.1}
  #allocation0 [shape = 'u32[]', space=smem, size = 0x4, offset = 0x4, fixed_abs, tag = 'smem constant byte address 0x4 - core index']
  #allocation1 [shape = 'u32[144,128]{1,0:T(1,128)}', space=vmem, size = 0x12000, scoped, tag = 'internal scratch']
  %s0 = inlined_call_operand.hbm [shape: f32[2,128], index: 0, kind: input, shape index: {}]
  %s1 = inlined_call_operand.vmem [shape: f32[1,128], index: 1, kind: input, shape index: {}]
  %s2 = inlined_call_operand.hbm [shape: f32[2,128], index: 2, kind: output, shape index: {}]
  %s3 = sld [smem:[#allocation0]]
  $region22: #{tpu_custom_call.1} parent=0
    _
  %s5 = ssub.s32 1, %s3
  %s6 = scalar_select 0, %s5, %s3
  $region1: #{tpu_custom_call.1} parent=0
    #allocation2 [shape = 'u8[1024]{0}', space=vmem, size = 0x400, scoped, tag = 'input window, operand 0, single buffered']
    #allocation3 [shape = 's32[1]{0}', space=sflag, size = 0x4, scoped, tag = 'scoped memory for tpu_custom_call.1']
    #allocation4 [shape = 's32[1]{0}', space=sflag, size = 0x4, scoped, tag = 'scoped memory for tpu_custom_call.1']
    #allocation5 [shape = 'u8[1024]{0}', space=vmem, size = 0x400, scoped, tag = 'output window, operand 0, single buffered']
    %7 = vsyncpa [#allocation3], 0
    %8 = vsyncpa [#allocation4], 0
    // Predicated region
    $region2: #{tpu_custom_call.1} parent=1 // pred_check
      _
    $region3: #{tpu_custom_call.1} parent=1 // pred_check_branch
      %10 = sbr.rel (0) target = $region5
    $region4: #{tpu_custom_call.1} parent=1 // pred_region
      %s12 = ssub.s32 32, 32
      %13 = vsyncadd [#allocation3], %s12
      %s15 = sshll.u32 [#allocation2], 4
      %s16 = int_to_ptr.vmem [resolvable:$true] %s15
      %18 = dma.hbm_to_vmem [thread:$0]  %s0, 32, %s16, [#allocation3]
    $region5: #{tpu_custom_call.1} parent=1 // pred_fallthru
      _
    // Predicated region
    $region6: #{tpu_custom_call.1} parent=1 // pred_check
      _
    $region7: #{tpu_custom_call.1} parent=1 // pred_check_branch
      %20 = sbr.rel (0) target = $region9
    $region8: #{tpu_custom_call.1} parent=1 // pred_region
      _
    $region9: #{tpu_custom_call.1} parent=1 // pred_fallthru
      _
    // Predicated region
    $region10: #{tpu_custom_call.1} parent=1 // pred_check
      _
    $region11: #{tpu_custom_call.1} parent=1 // pred_check_branch
      %22 = sbr.rel (0) target = $region13
    $region12: #{tpu_custom_call.1} parent=1 // pred_region
      %23 = dma.done [#allocation3], 32
    $region13: #{tpu_custom_call.1} parent=1 // pred_fallthru
      _
    %v24 = vld [vmem:[#allocation2] sm:$0x3]
    %v25 = vld [vmem:[%s1] sm:$0x1]
    %v27 = vlaneseq
    %v28 = vshrl.u32 %v27, 7
    %v29 = vsub.s32 0, %v28
    %v30 = vrot.slane %v25, %v29
    %v32 = vadd.f32 %v24, %v30
    %33 = vst [vmem:[#allocation5] sm:$0x3] %v32
    // Predicated region
    $region14: #{tpu_custom_call.1} parent=1 // pred_check
      _
    $region15: #{tpu_custom_call.1} parent=1 // pred_check_branch
      %35 = sbr.rel (0) target = $region17
    $region16: #{tpu_custom_call.1} parent=1 // pred_region
      %s37 = ssub.s32 32, 32
      %38 = vsyncadd [#allocation4], %s37
      %s40 = sshll.u32 [#allocation5], 4
      %s41 = int_to_ptr.vmem [resolvable:$true] %s40
      %43 = dma.vmem_to_hbm [thread:$0]  %s41, 32, %s2, [#allocation4]
    $region17: #{tpu_custom_call.1} parent=1 // pred_fallthru
      _
    // Predicated region
    $region18: #{tpu_custom_call.1} parent=1 // pred_check
      _
    $region19: #{tpu_custom_call.1} parent=1 // pred_check_branch
      %45 = sbr.rel (0) target = $region21
    $region20: #{tpu_custom_call.1} parent=1 // pred_region
      %46 = dma.done [#allocation4], 32
    $region21: #{tpu_custom_call.1} parent=1 // pred_fallthru
      _
    %47 = vsyncpa [#allocation3], 1
    %48 = vsyncpa [#allocation4], 1

</llo_original>
